<compile_context>
chip_gen: v7x
topology: tpu7x:2x2x1
jax: 0.10.0
libtpu: 0.0.40
codegen_flags: <defaults>
</compile_context>

<pallas_src>
import jax
import jax.numpy as jnp
from jax import lax
from jax.experimental import pallas as pl
from jax.experimental.pallas import tpu as pltpu

MARGIN = 2.0
EPS = 1e-6  # torch F.pairwise_distance default eps (added to the difference)


def _cdiv(a, b):
    return -(-a // b)


def _round_up(x, m):
    return ((x + m - 1) // m) * m


def _tpu_kind():
    try:
        dev = jax.devices()[0]
        if dev.platform != "tpu":
            return ""
        return dev.device_kind.lower()
    except Exception:
        return ""


def _default_num_cores():
    kind = _tpu_kind()
    # Chips with 2 TensorCores per chip (v7x, and v4/v5p megacore); v5e/v6e have 1.
    if any(tag in kind for tag in ("v7", "7x", "v4", "v5p")):
        return 2
    return 1


def _default_buffer_count():
    kind = _tpu_kind()
    # v7x HBM is ~2.3x v6e: triple-buffer the streamed inputs to hide DMA issue latency.
    if "v7" in kind or "7x" in kind:
        return 3
    return 2


def _make_kernel(tb, steps_per_core, batch, margin):
    def kernel(o1_ref, o2_ref, lab_ref, out_ref, acc_ref):
        c = pl.program_id(0)            # parallel (TensorCore) axis
        i = pl.program_id(1)            # streaming / reduction axis
        k = c * steps_per_core + i      # logical (unclamped) row-block id

        @pl.when(i == 0)
        def _init():
            acc_ref[...] = jnp.zeros_like(acc_ref)

        o1 = o1_ref[...].astype(jnp.float32)
        o2 = o2_ref[...].astype(jnp.float32)

        diff = o1 - o2 + EPS
        d2 = jnp.sum(diff * diff, axis=-1, keepdims=True)   # (tb, 1)
        dist = jnp.sqrt(d2)                                  # EUP slot (free)
        hinge = jnp.maximum(margin - dist, 0.0)

        lab = lab_ref[k]                                     # (tb, 1), resident labels
        # (1-y)*d2 + y*h^2  ==  d2 + y*(h^2 - d2)
        per_row = d2 + lab * (hinge * hinge - d2)            # (tb, 1)

        # Mask garbage rows of a partial last block and fully out-of-range (clamped,
        # re-read) blocks; jnp.where selects, so NaN/Inf garbage never propagates.
        row = lax.broadcasted_iota(jnp.int32, (tb, 1), 0)
        valid = (k * tb + row) < batch

        # Vector accumulator: one VPU add per step, no per-step cross-sublane reduce.
        acc_ref[...] += jnp.where(valid, per_row, 0.0)

        @pl.when(i == steps_per_core - 1)
        def _finalize():
            # Single reduce at the end; lane-dense (8,128) store of this core's partial.
            out_ref[...] = jnp.broadcast_to(jnp.sum(acc_ref[...]), out_ref.shape)

    return kernel


def contrastive_loss(output1, output2, label, *, margin=MARGIN, num_cores=None,
                     tb=None, buffer_count=None, tile_bytes=4 << 20, interpret=False):
    """output1, output2: (B, D); label: (B,) or (B, 1). Returns the scalar f32 loss."""
    B, D = output1.shape
    label = label.reshape(-1).astype(jnp.float32)
    assert label.shape[0] == B

    if num_cores is None:
        num_cores = _default_num_cores()
    if buffer_count is None:
        buffer_count = _default_buffer_count()

    in_itemsize = jnp.dtype(output1.dtype).itemsize
    mult = max(8, 32 // in_itemsize)          # sublane granularity (f32: 8, bf16: 16)

    # Tile rows from a VMEM byte budget (~tile_bytes per streamed input tile).
    if tb is None:
        tb = tile_bytes // max(D * in_itemsize, 1)
    tb = min(int(tb), 4096)                                  # bounds the (tb,1) accumulator
    tb = min(tb, _round_up(_cdiv(B, num_cores), mult))       # never more than one core's rows
    tb = max(mult, (tb // mult) * mult)

    G = _cdiv(B, tb)                          # number of real (tb, D) row blocks
    steps_per_core = _cdiv(G, num_cores)
    g_grid = num_cores * steps_per_core       # grid coverage in blocks (>= G)

    # Labels are tiny: zero-pad to full grid coverage and keep them RESIDENT in VMEM
    # (single DMA, no per-step label transfer).  Padding a (B,)-vector is negligible;
    # the big (B, D) tensors are NOT padded or copied.
    lab = jnp.pad(label, (0, g_grid * tb - B)).reshape(g_grid, tb, 1)

    kernel = _make_kernel(tb, steps_per_core, B, float(margin))

    def data_map(c, i):
        # Clamp trailing fully out-of-range steps onto the last real block; the in-kernel
        # row mask zeroes their contribution (avoids relying on fully-OOB DMA behavior).
        return (jnp.minimum(c * steps_per_core + i, G - 1), 0)

    data_extra = {}
    if buffer_count != 2:
        data_extra["pipeline_mode"] = pl.Buffered(buffer_count)

    out_rows = num_cores * 8
    vmem_need = (2 * buffer_count * tb * D * in_itemsize      # streamed o1/o2 tiles
                 + 2 * g_grid * tb * 128 * 4                  # resident labels (lane-padded)
                 + tb * 128 * 4                               # (tb, 1) accumulator
                 + 2 * 8 * 128 * 4)                           # output tile
    kind = _tpu_kind()
    cap = (56 << 20) if ("v7" in kind or "7x" in kind) else (100 << 20)
    vmem_limit = int(min(max(vmem_need + (4 << 20), 32 << 20), cap))

    cost = pl.CostEstimate(
        flops=4 * B * D + 10 * B,
        transcendentals=B,
        bytes_accessed=2 * B * D * in_itemsize + B * 4 + out_rows * 128 * 4,
    )

    partials = pl.pallas_call(
        kernel,
        out_shape=jax.ShapeDtypeStruct((out_rows, 128), jnp.float32),
        grid_spec=pltpu.PrefetchScalarGridSpec(
            num_scalar_prefetch=0,
            grid=(num_cores, steps_per_core),
            in_specs=[
                pl.BlockSpec((tb, D), data_map, **data_extra),
                pl.BlockSpec((tb, D), data_map, **data_extra),
                pl.BlockSpec((g_grid, tb, 1), lambda c, i: (0, 0, 0)),   # resident labels
            ],
            out_specs=pl.BlockSpec((8, 128), lambda c, i: (c, 0)),
            scratch_shapes=[pltpu.VMEM((tb, 1), jnp.float32)],
        ),
        compiler_params=pltpu.CompilerParams(
            dimension_semantics=("parallel", "arbitrary"),
            vmem_limit_bytes=vmem_limit,
        ),
        cost_estimate=cost,
        interpret=interpret,
    )(output1, output2, lab)

    # Each core's partial sum is broadcast across its (8, 128) tile; take lane 0 of row 0.
    per_core = partials[::8, 0]
    return jnp.sum(per_core) / B


def _reference(output1, output2, label, margin=MARGIN):
    o1 = output1.astype(jnp.float32)
    o2 = output2.astype(jnp.float32)
    lab = label.reshape(-1, 1).astype(jnp.float32)
    d = jnp.sqrt(jnp.sum((o1 - o2 + EPS) ** 2, axis=-1, keepdims=True))
    return jnp.mean((1.0 - lab) * d ** 2 + lab * jnp.maximum(margin - d, 0.0) ** 2)


if __name__ == "__main__":
    key = jax.random.PRNGKey(0)
    k1, k2, k3 = jax.random.split(key, 3)

    B, D = 24, 32
    output1 = jax.random.normal(k1, (B, D), dtype=jnp.float32)
    output2 = jax.random.normal(k2, (B, D), dtype=jnp.float32)
    label = jax.random.bernoulli(k3, 0.5, (B, 1)).astype(jnp.float32)

    ref = _reference(output1, output2, label)

    # 1) Default tiling / auto-detected core count.
    loss = jax.block_until_ready(contrastive_loss(output1, output2, label))
    assert jnp.allclose(loss, ref, rtol=1e-5, atol=1e-5), (loss, ref)

    # 2) Multi-step streaming with a ragged last block (B=24, tb=16): exercises the
    #    in-kernel tail mask with no wrapper-side padding of the big inputs.
    loss2 = jax.block_until_ready(contrastive_loss(output1, output2, label, tb=16))
    assert jnp.allclose(loss2, ref, rtol=1e-5, atol=1e-5), (loss2, ref)

    # 3) Ragged batch (B=21) + forced 2-"core" grid + tiny tiles: exercises the clamped
    #    index_map (fully out-of-range steps re-read the last block and are masked) and
    #    the garbage-row masking of the partial block.
    B2 = 21
    ref2 = _reference(output1[:B2], output2[:B2], label[:B2])
    loss3 = jax.block_until_ready(
        contrastive_loss(output1[:B2], output2[:B2], label[:B2], tb=8, num_cores=2))
    assert jnp.allclose(loss3, ref2, rtol=1e-5, atol=1e-5), (loss3, ref2)

    print("KERNEL_OK")
</pallas_src>

<mosaic_0001>
module attributes {stable_mosaic.version = 11 : i64} {
  func.func @kernel(%arg0: i32, %arg1: i32, %arg2: memref<24x32xf32, #tpu.memory_space<vmem>>, %arg3: memref<24x32xf32, #tpu.memory_space<vmem>>, %arg4: memref<1x24x1xf32, #tpu.memory_space<vmem>>, %arg5: memref<8x128xf32, #tpu.memory_space<vmem>>, %arg6: memref<24x1xf32, #tpu.memory_space<vmem>>) attributes {dimension_semantics = [#tpu.dimension_semantics<parallel>, #tpu.dimension_semantics<arbitrary>], iteration_bounds = array<i64: 1, 1>, scalar_prefetch = 0 : i64, scratch_operands = 1 : i64, tpu.core_type = #tpu.core_type<tc>, window_params = [{transform_indices = @transform_0, window_bounds = array<i64: 24, 32>}, {transform_indices = @transform_1, window_bounds = array<i64: 24, 32>}, {pipeline_mode = #tpu.pipeline_mode<synchronous>, transform_indices = @transform_2, window_bounds = array<i64: 1, 24, 1>}, {transform_indices = @transform_3, window_bounds = array<i64: 8, 128>}]} {
    %c1_i32 = arith.constant 1 : i32
    %0 = arith.muli %arg0, %c1_i32 : i32
    %1 = arith.addi %0, %arg1 : i32
    %c0_i32 = arith.constant 0 : i32
    %2 = arith.cmpi eq, %arg1, %c0_i32 : i32
    %3 = arith.extui %2 : i1 to i32
    %c0_i32_0 = arith.constant 0 : i32
    %4 = arith.cmpi ne, %3, %c0_i32_0 : i32
    scf.if %4 {
      %cst_17 = arith.constant 0.000000e+00 : f32
      %39 = vector.broadcast %cst_17 : f32 to vector<24x1xf32>
      %c0_18 = arith.constant 0 : index
      %c0_19 = arith.constant 0 : index
      %40 = vector.load %arg6[%c0_18, %c0_19] : memref<24x1xf32, #tpu.memory_space<vmem>>, vector<24x1xf32>
      tpu.vector_store %arg6[%c0_18, %c0_19], %39 {strides = array<i32>} : memref<24x1xf32, #tpu.memory_space<vmem>>, vector<24x1xf32>,
    } else {
    }
    %c0 = arith.constant 0 : index
    %c0_1 = arith.constant 0 : index
    %5 = vector.load %arg2[%c0, %c0_1] : memref<24x32xf32, #tpu.memory_space<vmem>>, vector<24x32xf32>
    %c0_2 = arith.constant 0 : index
    %c0_3 = arith.constant 0 : index
    %6 = vector.load %arg3[%c0_2, %c0_3] : memref<24x32xf32, #tpu.memory_space<vmem>>, vector<24x32xf32>
    %7 = arith.subf %5, %6 : vector<24x32xf32>
    %cst = arith.constant 9.99999997E-7 : f32
    %8 = vector.broadcast %cst : f32 to vector<24x32xf32>
    %9 = arith.addf %7, %8 : vector<24x32xf32>
    %10 = arith.mulf %9, %9 : vector<24x32xf32>
    %cst_4 = arith.constant dense<0.000000e+00> : vector<24xf32>
    %11 = vector.multi_reduction <add>, %10, %cst_4 [1] : vector<24x32xf32> to vector<24xf32>
    %12 = vector.shape_cast %11 : vector<24xf32> to vector<24x1xf32>
    %13 = math.sqrt %12 : vector<24x1xf32>
    %cst_5 = arith.constant 2.000000e+00 : f32
    %14 = vector.broadcast %cst_5 : f32 to vector<24x1xf32>
    %15 = arith.subf %14, %13 : vector<24x1xf32>
    %cst_6 = arith.constant 0.000000e+00 : f32
    %16 = vector.broadcast %cst_6 : f32 to vector<24x1xf32>
    %17 = arith.maximumf %15, %16 : vector<24x1xf32>
    %18 = arith.index_cast %1 : i32 to index
    %c0_7 = arith.constant 0 : index
    %c0_8 = arith.constant 0 : index
    %19 = vector.load %arg4[%18, %c0_7, %c0_8] : memref<1x24x1xf32, #tpu.memory_space<vmem>>, vector<1x24x1xf32>
    %20 = vector.shape_cast %19 : vector<1x24x1xf32> to vector<24x1xf32>
    %21 = arith.mulf %17, %17 : vector<24x1xf32>
    %22 = arith.subf %21, %12 : vector<24x1xf32>
    %23 = arith.mulf %20, %22 : vector<24x1xf32>
    %24 = arith.addf %12, %23 : vector<24x1xf32>
    %25 = tpu.iota {dimensions = array<i32: 0>} : vector<24x1xi32>
    %c24_i32 = arith.constant 24 : i32
    %26 = arith.muli %1, %c24_i32 : i32
    %27 = vector.broadcast %26 : i32 to vector<24x1xi32>
    %28 = arith.addi %27, %25 : vector<24x1xi32>
    %c24_i32_9 = arith.constant 24 : i32
    %29 = vector.broadcast %c24_i32_9 : i32 to vector<24x1xi32>
    %30 = arith.cmpi slt, %28, %29 : vector<24x1xi32>
    %c0_10 = arith.constant 0 : index
    %c0_11 = arith.constant 0 : index
    %31 = vector.load %arg6[%c0_10, %c0_11] : memref<24x1xf32, #tpu.memory_space<vmem>>, vector<24x1xf32>
    %cst_12 = arith.constant 0.000000e+00 : f32
    %32 = vector.broadcast %cst_12 : f32 to vector<24x1xf32>
    %33 = arith.select %30, %24, %32 : vector<24x1xi1>, vector<24x1xf32>
    %34 = arith.addf %31, %33 : vector<24x1xf32>
    %c0_13 = arith.constant 0 : index
    %c0_14 = arith.constant 0 : index
    %35 = vector.load %arg6[%c0_13, %c0_14] : memref<24x1xf32, #tpu.memory_space<vmem>>, vector<24x1xf32>
    tpu.vector_store %arg6[%c0_13, %c0_14], %34 {strides = array<i32>} : memref<24x1xf32, #tpu.memory_space<vmem>>, vector<24x1xf32>,
    %c0_i32_15 = arith.constant 0 : i32
    %36 = arith.cmpi eq, %arg1, %c0_i32_15 : i32
    %37 = arith.extui %36 : i1 to i32
    %c0_i32_16 = arith.constant 0 : i32
    %38 = arith.cmpi ne, %37, %c0_i32_16 : i32
    scf.if %38 {
      %c0_17 = arith.constant 0 : index
      %c0_18 = arith.constant 0 : index
      %39 = vector.load %arg6[%c0_17, %c0_18] : memref<24x1xf32, #tpu.memory_space<vmem>>, vector<24x1xf32>
      %40 = vector.shape_cast %39 : vector<24x1xf32> to vector<1x24x1xf32>
      %cst_19 = arith.constant dense<0.000000e+00> : vector<1xf32>
      %41 = vector.multi_reduction <add>, %40, %cst_19 [1, 2] : vector<1x24x1xf32> to vector<1xf32>
      %42 = vector.shape_cast %41 : vector<1xf32> to vector<1x1x1xf32>
      %43 = vector.extract %42[0, 0, 0] : f32 from vector<1x1x1xf32>
      %44 = vector.broadcast %43 : f32 to vector<8x128xf32>
      %c0_20 = arith.constant 0 : index
      %c0_21 = arith.constant 0 : index
      %45 = vector.load %arg5[%c0_20, %c0_21] : memref<8x128xf32, #tpu.memory_space<vmem>>, vector<8x128xf32>
      tpu.vector_store %arg5[%c0_20, %c0_21], %44 {strides = array<i32>} : memref<8x128xf32, #tpu.memory_space<vmem>>, vector<8x128xf32>,
    } else {
    }
    return
  }
  func.func @transform_0(%arg0: i32, %arg1: i32) -> (i32, i32) {
    %c1_i32 = arith.constant 1 : i32
    %0 = arith.muli %arg0, %c1_i32 : i32
    %1 = arith.addi %0, %arg1 : i32
    %c0_i32 = arith.constant 0 : i32
    %2 = arith.minsi %1, %c0_i32 : i32
    %c0_i32_0 = arith.constant 0 : i32
    %c0_i32_1 = arith.constant 0 : i32
    return %2, %c0_i32_0 : i32, i32
  }
  func.func @transform_1(%arg0: i32, %arg1: i32) -> (i32, i32) {
    %c1_i32 = arith.constant 1 : i32
    %0 = arith.muli %arg0, %c1_i32 : i32
    %1 = arith.addi %0, %arg1 : i32
    %c0_i32 = arith.constant 0 : i32
    %2 = arith.minsi %1, %c0_i32 : i32
    %c0_i32_0 = arith.constant 0 : i32
    %c0_i32_1 = arith.constant 0 : i32
    return %2, %c0_i32_0 : i32, i32
  }
  func.func @transform_2(%arg0: i32, %arg1: i32) -> (i32, i32, i32) {
    %c0_i32 = arith.constant 0 : i32
    %c0_i32_0 = arith.constant 0 : i32
    %c0_i32_1 = arith.constant 0 : i32
    %c0_i32_2 = arith.constant 0 : i32
    return %c0_i32, %c0_i32_0, %c0_i32_1 : i32, i32, i32
  }
  func.func @transform_3(%arg0: i32, %arg1: i32) -> (i32, i32) {
    %c0_i32 = arith.constant 0 : i32
    %c0_i32_0 = arith.constant 0 : i32
    return %arg0, %c0_i32 : i32, i32
  }
}

</mosaic_0001>

<llo_original>
// kernel: tpu_custom_call.1
$region0: #{tpu_custom_call.1}
  #allocation0 [shape = 'u32[]', space=smem, size = 0x4, offset = 0x4, fixed_abs, tag = 'smem constant byte address 0x4 - core index']
  #allocation1 [shape = 'u32[144,128]{1,0:T(1,128)}', space=vmem, size = 0x12000, scoped, tag = 'internal scratch']
  #allocation2 [shape = 'f32[24,1]{1,0:T(8,128)}', space=vmem, size = 0x3000, scoped, tag = 'scratch operand']
  %s0 = inlined_call_operand.vmem [shape: f32[24,32], index: 0, kind: input, shape index: {}]
  %s1 = inlined_call_operand.hbm [shape: f32[24,32], index: 1, kind: input, shape index: {}]
  %s2 = inlined_call_operand.vmem [shape: f32[1,24,1], index: 2, kind: input, shape index: {}]
  %s3 = inlined_call_operand.hbm [shape: f32[8,128], index: 3, kind: output, shape index: {}]
  %s4 = sld [smem:[#allocation0]]
  $region34: #{tpu_custom_call.1} parent=0
    _
  %s6 = ssub.s32 1, %s4
  %s7 = scalar_select 0, %s6, %s4
  $region1: #{tpu_custom_call.1} parent=0
    #allocation3 [shape = 'u8[12288]{0}', space=vmem, size = 0x3000, scoped, tag = 'input window, operand 1, single buffered']
    #allocation4 [shape = 's32[1]{0}', space=sflag, size = 0x4, scoped, tag = 'scoped memory for tpu_custom_call.1']
    #allocation5 [shape = 's32[1]{0}', space=sflag, size = 0x4, scoped, tag = 'scoped memory for tpu_custom_call.1']
    #allocation6 [shape = 'u8[4096]{0}', space=vmem, size = 0x1000, scoped, tag = 'output window, operand 0, single buffered']
    %8 = vsyncpa [#allocation4], 0
    %9 = vsyncpa [#allocation5], 0
    // Predicated region
    $region2: #{tpu_custom_call.1} parent=1 // pred_check
      _
    $region3: #{tpu_custom_call.1} parent=1 // pred_check_branch
      %11 = sbr.rel (0) target = $region5
    $region4: #{tpu_custom_call.1} parent=1 // pred_region
      %s12 = sadd.s32 0, 0
      %p13 = scmp.lt.s32.totalorder %s12, 0
      %s14 = scalar_select %p13, %s12, 0
      %s15 = smul.u32 3, %s14
      %p16 = scmp.lt.s32.totalorder %s15, 2
      %s17 = scalar_select %p16, %s15, 2
      %s18 = smul.addr %s17, 8
      %s19 = scalar_lea.vmem %s0, %s18
      %s20 = sadd.s32 0, 0
      %p21 = scmp.lt.s32.totalorder %s20, 0
      %s22 = scalar_select %p21, %s20, 0
      %s23 = smul.u32 3, %s22
    $region5: #{tpu_custom_call.1} parent=1 // pred_fallthru
      _
    // Predicated region
    $region6: #{tpu_custom_call.1} parent=1 // pred_check
      _
    $region7: #{tpu_custom_call.1} parent=1 // pred_check_branch
      %25 = sbr.rel (0) target = $region9
    $region8: #{tpu_custom_call.1} parent=1 // pred_region
      %s26 = sadd.s32 0, 0
      %p27 = scmp.lt.s32.totalorder %s26, 0
      %s28 = scalar_select %p27, %s26, 0
      %s29 = smul.u32 3, %s28
      %s31 = ssub.s32 384, 384
      %32 = vsyncadd [#allocation4], %s31
      %s33 = smul.addr %s29, 128
      %s34 = scalar_lea.hbm %s1, %s33
      %s35 = sshll.u32 [#allocation3], 4
      %s36 = int_to_ptr.vmem [resolvable:$true] %s35
      %41 = dma.hbm_to_vmem [thread:$0]  %s34, 384, %s36, [#allocation4], 128, 128, 8
    $region9: #{tpu_custom_call.1} parent=1 // pred_fallthru
      _
    // Predicated region
    $region10: #{tpu_custom_call.1} parent=1 // pred_check
      _
    $region11: #{tpu_custom_call.1} parent=1 // pred_check_branch
      %43 = sbr.rel (0) target = $region13
    $region12: #{tpu_custom_call.1} parent=1 // pred_region
      _
    $region13: #{tpu_custom_call.1} parent=1 // pred_fallthru
      _
    // Predicated region
    $region14: #{tpu_custom_call.1} parent=1 // pred_check
      _
    $region15: #{tpu_custom_call.1} parent=1 // pred_check_branch
      %45 = sbr.rel (0) target = $region17
    $region16: #{tpu_custom_call.1} parent=1 // pred_region
      %46 = dma.done [#allocation4], 384
    $region17: #{tpu_custom_call.1} parent=1 // pred_fallthru
      _
    %s47 = sadd.s32 0, 0
    %p48 = scmp.lt.s32.totalorder %s47, 0
    %s49 = scalar_select %p48, %s47, 0
    %s50 = smul.u32 3, %s49
    %p51 = scmp.lt.s32.totalorder %s50, 2
    %s52 = scalar_select %p51, %s50, 2
    %s53 = smul.addr %s52, 8
    %s54 = scalar_lea.vmem %s0, %s53
    %s55 = sadd.s32 0, 0
    %p56 = scmp.lt.s32.totalorder %s55, 0
    %s57 = scalar_select %p56, %s55, 0
    %s58 = smul.u32 3, %s57
    %p59 = scmp.lt.s32.totalorder %s58, 2
    %s60 = scalar_select %p59, %s58, 2
    %s61 = smul.addr %s60, 8
    %s62 = scalar_lea.vmem %s0, %s61
    %s63 = sadd.s32 0, 0
    %p64 = scmp.lt.s32.totalorder %s63, 0
    %s65 = scalar_select %p64, %s63, 0
    %s66 = smul.u32 3, %s65
    %s67 = sadd.s32 0, 0
    %p68 = scmp.lt.s32.totalorder %s67, 0
    %s69 = scalar_select %p68, %s67, 0
    %s70 = smul.u32 3, %s69
    %s71 = sadd.s32 0, 0
    %p72 = scmp.eq.s32.totalorder 0, 0
    // Predicated region
    $region18: #{tpu_custom_call.1} parent=1 // pred_check
      %p73 = pneg %p72
    $region19: #{tpu_custom_call.1} parent=1 // pred_check_branch
      %75 = sbr.rel (%p73) target = $region21
    $region20: #{tpu_custom_call.1} parent=1 // pred_region
      %vm76 = vcmask 7168
      %77 = vst.msk [vmem:[#allocation2] sm:$0xff] %vm76, 0.0
      %78 = vst.msk [vmem:[#allocation2 + $0x8] sm:$0xff] %vm76, 0.0
      %79 = vst.msk [vmem:[#allocation2 + $0x10] sm:$0xff] %vm76, 0.0
    $region21: #{tpu_custom_call.1} parent=1 // pred_fallthru
      _
    %v80 = vld [vmem:[%s62] sm:$0xff]
    %v81 = vld [vmem:[%s62 + $0x8] sm:$0xff]
    %v82 = vld [vmem:[%s62 + $0x10] sm:$0xff]
    %v83 = vld [vmem:[#allocation3] sm:$0xff]
    %v84 = vld [vmem:[#allocation3 + $0x8] sm:$0xff]
    %v85 = vld [vmem:[#allocation3 + $0x10] sm:$0xff]
    %v86 = vsub.f32 %v80, %v83
    %v87 = vsub.f32 %v81, %v84
    %v88 = vsub.f32 %v82, %v85
    %v89 = vadd.f32 %v86, 1e-06
    %v90 = vadd.f32 %v87, 1e-06
    %v91 = vadd.f32 %v88, 1e-06
    %v92 = vmul.f32 %v89, %v89
    %v93 = vmul.f32 %v90, %v90
    %v94 = vmul.f32 %v91, %v91
    %vm95 = vcmask 261120
    %v96 = vsel %vm95, %v92, 0.0
    %97 = vadd.xlane.f32.xlu0 %v96
    %v98 = vpop.xlane.xlu0 %97
    %v99 = vsel %vm95, %v93, 0.0
    %100 = vadd.xlane.f32.xlu0 %v99
    %v101 = vpop.xlane.xlu0 %100
    %v102 = vsel %vm95, %v94, 0.0
    %103 = vadd.xlane.f32.xlu0 %v102
    %v104 = vpop.xlane.xlu0 %103
    %v105 = vrsqrt.pop %v98
    %v106 = vmul.f32 %v98, %v105
    %vm107 = vcmp.eq.f32.partialorder %v98, inf
    %v108 = vsel %vm107, %v98, %v106
    %vm109 = vcmp.eq.f32.partialorder %v98, 0.0
    %v110 = vand.u32 %v98, 2147483648
    %v111 = vsel %vm109, %v110, %v108
    %v112 = vrsqrt.pop %v101
    %v113 = vmul.f32 %v101, %v112
    %vm114 = vcmp.eq.f32.partialorder %v101, inf
    %v115 = vsel %vm114, %v101, %v113
    %vm116 = vcmp.eq.f32.partialorder %v101, 0.0
    %v117 = vand.u32 %v101, 2147483648
    %v118 = vsel %vm116, %v117, %v115
    %v119 = vrsqrt.pop %v104
    %v120 = vmul.f32 %v104, %v119
    %vm121 = vcmp.eq.f32.partialorder %v104, inf
    %v122 = vsel %vm121, %v104, %v120
    %vm123 = vcmp.eq.f32.partialorder %v104, 0.0
    %v124 = vand.u32 %v104, 2147483648
    %v125 = vsel %vm123, %v124, %v122
    %v126 = vsub.f32 2.0, %v111
    %v127 = vsub.f32 2.0, %v118
    %v128 = vsub.f32 2.0, %v125
    %v129 = vmax.f32 %v126, 0.0
    %v130 = vmax.f32 %v127, 0.0
    %v131 = vmax.f32 %v128, 0.0
    %s132 = smul.u32 %s71, 24
    %s133 = scalar_lea.vmem %s2, %s132
    %v134 = vld [vmem:[%s133] sm:$0xff]
    %v135 = vld [vmem:[%s133 + $0x8] sm:$0xff]
    %v136 = vld [vmem:[%s133 + $0x10] sm:$0xff]
    %v137 = vmul.f32 %v129, %v129
    %v138 = vmul.f32 %v130, %v130
    %v139 = vmul.f32 %v131, %v131
    %v140 = vsub.f32 %v137, %v98
    %v141 = vsub.f32 %v138, %v101
    %v142 = vsub.f32 %v139, %v104
    %v143 = vmul.f32 %v134, %v140
    %v144 = vmul.f32 %v135, %v141
    %v145 = vmul.f32 %v136, %v142
    %v146 = vadd.f32 %v98, %v143
    %v147 = vadd.f32 %v101, %v144
    %v148 = vadd.f32 %v104, %v145
    %v149 = vlaneseq
    %v150 = vshrl.u32 %v149, 7
    %v151 = vadd.s32 %v150, 8
    %v152 = vadd.s32 %v150, 16
    %v153 = vstv %s132
    %v154 = vadd.s32 %v153, %v150
    %v155 = vadd.s32 %v153, %v151
    %v156 = vadd.s32 %v153, %v152
    %vm157 = vcmp.lt.s32.totalorder %v154, 24
    %vm158 = vcmp.lt.s32.totalorder %v155, 24
    %vm159 = vcmp.lt.s32.totalorder %v156, 24
    %v160 = vld [vmem:[#allocation2] sm:$0xff]
    %v161 = vld [vmem:[#allocation2 + $0x8] sm:$0xff]
    %v162 = vld [vmem:[#allocation2 + $0x10] sm:$0xff]
    %v163 = vsel %vm157, %v146, 0.0
    %v164 = vsel %vm158, %v147, 0.0
    %v165 = vsel %vm159, %v148, 0.0
    %v166 = vadd.f32 %v160, %v163
    %v167 = vadd.f32 %v161, %v164
    %v168 = vadd.f32 %v162, %v165
    %vm169 = vcmask 7168
    %170 = vst.msk [vmem:[#allocation2] sm:$0xff] %vm169, %v166
    %171 = vst.msk [vmem:[#allocation2 + $0x8] sm:$0xff] %vm169, %v167
    %172 = vst.msk [vmem:[#allocation2 + $0x10] sm:$0xff] %vm169, %v168
    // Predicated region
    $region22: #{tpu_custom_call.1} parent=1 // pred_check
      %p173 = pneg %p72
    $region23: #{tpu_custom_call.1} parent=1 // pred_check_branch
      %175 = sbr.rel (%p173) target = $region25
    $region24: #{tpu_custom_call.1} parent=1 // pred_region
      %v176 = vld [vmem:[#allocation2] sm:$0xff]
      %v177 = vld [vmem:[#allocation2 + $0x8] sm:$0xff]
      %v178 = vld [vmem:[#allocation2 + $0x10] sm:$0xff]
      %v179 = vsel %vm169, %v176, 0.0
      %v180 = vsel %vm169, %v177, 0.0
      %v181 = vadd.f32 %v179, %v180
      %v182 = vsel %vm169, %v178, 0.0
      %v183 = vadd.f32 %v181, %v182
      %184 = vadd.xlane.f32.xlu0 %v183
      %v185 = vpop.xlane.xlu0 %184
      %v186 = vrot.slane %v185, 4
      %v187 = vadd.f32 %v185, %v186
      %v188 = vrot.slane %v187, 2
      %v189 = vadd.f32 %v187, %v188
      %v190 = vrot.slane %v189, 1
      %v191 = vadd.f32 %v189, %v190
      %s192 = vtos %v191
      %v193 = vstv %s192
      %194 = vst [vmem:[#allocation6] sm:$0xff] %v193
    $region25: #{tpu_custom_call.1} parent=1 // pred_fallthru
      _
    // Predicated region
    $region26: #{tpu_custom_call.1} parent=1 // pred_check
      _
    $region27: #{tpu_custom_call.1} parent=1 // pred_check_branch
      %196 = sbr.rel (0) target = $region29
    $region28: #{tpu_custom_call.1} parent=1 // pred_region
      %s198 = ssub.s32 128, 128
      %199 = vsyncadd [#allocation5], %s198
      %s201 = sshll.u32 [#allocation6], 4
      %s202 = int_to_ptr.vmem [resolvable:$true] %s201
      %204 = dma.vmem_to_hbm [thread:$0]  %s202, 128, %s3, [#allocation5]
    $region29: #{tpu_custom_call.1} parent=1 // pred_fallthru
      _
    // Predicated region
    $region30: #{tpu_custom_call.1} parent=1 // pred_check
      _
    $region31: #{tpu_custom_call.1} parent=1 // pred_check_branch
      %206 = sbr.rel (0) target = $region33
    $region32: #{tpu_custom_call.1} parent=1 // pred_region
      %207 = dma.done [#allocation5], 128
    $region33: #{tpu_custom_call.1} parent=1 // pred_fallthru
      _
    %208 = vsyncpa [#allocation4], 1
    %209 = vsyncpa [#allocation5], 1

</llo_original>
